<compile_context>
chip_gen: v5e
topology: v5e:2x2
jax: 0.10.0
libtpu: 0.0.40
codegen_flags: <defaults>
</compile_context>

<pallas_src>
import functools

import jax
import jax.numpy as jnp
from jax.experimental import pallas as pl
from jax.experimental.pallas import tpu as pltpu

LANE = 128     # lane width / padded hidden feature dim
SUBLANE = 8    # sublane granularity


def _cdiv(a, b):
    return (a + b - 1) // b


def _round_up(n, m):
    return _cdiv(n, m) * m


def _mlp_kernel(n_layers, num_outputs, neg_slope, x_ref, w_ref, b_ref, o_ref):
    """Fused MLP forward for one batch tile.

    x_ref: [TB, nin_p]           real input lanes only (nin_p <= 128)
    w_ref: [n_layers, 128, 128]  zero-padded weights, compute dtype (resident)
    b_ref: [n_layers, 1, 128]    zero-padded biases, f32 (resident)
    o_ref: [TB, num_outputs]     real output lanes only
    """
    cd = w_ref.dtype
    nin_p = x_ref.shape[-1]
    # First layer: narrow contraction over the real input lanes; result is the
    # zero-padded 128-wide hidden state (padded lanes stay exactly 0).
    h = jnp.dot(x_ref[...].astype(cd), w_ref[0, :nin_p, :],
                preferred_element_type=jnp.float32) + b_ref[0]
    for i in range(1, n_layers):              # static unroll; n_layers is small
        h = jnp.where(h >= 0.0, h, neg_slope * h)        # LeakyReLU (f32)
        h = jnp.dot(h.astype(cd), w_ref[i],
                    preferred_element_type=jnp.float32) + b_ref[i]
    # Store only the real output lanes (masked store; tiny HBM write).
    o_ref[...] = h[:, :num_outputs].astype(o_ref.dtype)


def pack_params(weights, biases, param_dtype=jnp.bfloat16):
    """weights[i]: [in_i, out_i] (already transposed from torch's [out,in]);
    biases[i]: [out_i] or [1, out_i].
    Returns (w_slab [n_layers,128,128] param_dtype, b_slab [n_layers,1,128] f32),
    both zero-padded."""
    n_layers = len(weights)
    w_slab = jnp.zeros((n_layers, LANE, LANE), param_dtype)
    b_slab = jnp.zeros((n_layers, 1, LANE), jnp.float32)
    for i, (w, b) in enumerate(zip(weights, biases)):
        fan_in, fan_out = w.shape
        assert fan_in <= LANE and fan_out <= LANE
        w_slab = w_slab.at[i, :fan_in, :fan_out].set(w.astype(param_dtype))
        b_slab = b_slab.at[i, 0, :fan_out].set(
            jnp.reshape(b, (-1,)).astype(jnp.float32))
    return w_slab, b_slab


def task_network_forward(x, w_slab, b_slab, num_outputs, *, neg_slope=0.1,
                         block_batch=2048):
    """x: [B, num_inputs] f32; w_slab: [n_layers,128,128] (compute dtype);
    b_slab: [n_layers,1,128] f32. Returns [B, num_outputs]."""
    batch, num_inputs = x.shape
    n_layers = w_slab.shape[0]
    nin_p = max(SUBLANE, _round_up(num_inputs, SUBLANE))
    assert nin_p <= LANE and num_outputs <= LANE

    # Few, large batch blocks (per-step overhead >> per-step compute for this
    # tiny MLP); keep the block count even when >1 so both v7x TensorCores
    # share the "parallel" batch axis.
    num_blocks = max(1, _cdiv(batch, block_batch))
    if num_blocks > 1 and num_blocks % 2:
        num_blocks += 1
    tb = max(SUBLANE, _round_up(_cdiv(batch, num_blocks), SUBLANE))
    batch_pad = num_blocks * tb

    # Batch-pad (and 8-align the feature dim if needed) only when required;
    # zeros propagate exactly through every layer and are sliced off below.
    if batch_pad != batch or nin_p != num_inputs:
        x_in = jnp.zeros((batch_pad, nin_p), x.dtype)
        x_in = x_in.at[:batch, :num_inputs].set(x)
    else:
        x_in = x

    kernel = functools.partial(_mlp_kernel, n_layers, num_outputs, neg_slope)

    out = pl.pallas_call(
        kernel,
        out_shape=jax.ShapeDtypeStruct((batch_pad, num_outputs), x.dtype),
        grid=(num_blocks,),
        in_specs=[
            # x streams over the batch grid (double-buffered by the pipeline).
            pl.BlockSpec((tb, nin_p), lambda i: (i, 0)),
            # parameters: constant index_map -> resident in VMEM.
            pl.BlockSpec((n_layers, LANE, LANE), lambda i: (0, 0, 0)),
            pl.BlockSpec((n_layers, 1, LANE), lambda i: (0, 0, 0)),
        ],
        out_specs=pl.BlockSpec((tb, num_outputs), lambda i: (i, 0)),
        compiler_params=pltpu.CompilerParams(
            dimension_semantics=("parallel",)),
    )(x_in, w_slab, b_slab)

    return out[:batch] if batch_pad != batch else out


def init_task_network_params(key, num_inputs, num_outputs,
                             hidden_layer_size, hidden_layer_count):
    """Mirrors torch.nn.Linear default init; weights are returned pre-transposed
    to [in, out] and biases as [1, out]."""
    dims = [num_inputs] + [hidden_layer_size] * hidden_layer_count + [num_outputs]
    weights, biases = [], []
    for i in range(len(dims) - 1):
        fan_in, fan_out = dims[i], dims[i + 1]
        key, wk, bk = jax.random.split(key, 3)
        bound = 1.0 / jnp.sqrt(fan_in)
        w = jax.random.uniform(wk, (fan_in, fan_out), jnp.float32, -bound, bound)
        b = jax.random.uniform(bk, (1, fan_out), jnp.float32, -bound, bound)
        weights.append(w)
        biases.append(b)
    return weights, biases


def task_network_reference(x, weights, biases, neg_slope=0.1):
    h = x
    n = len(weights)
    for i, (w, b) in enumerate(zip(weights, biases)):
        h = h @ w + b
        if i < n - 1:
            h = jnp.where(h >= 0.0, h, neg_slope * h)
    return h


if __name__ == "__main__":
    num_inputs = 16
    num_outputs = 4
    hidden_layer_size = 32
    hidden_layer_count = 3
    batch = 8

    key = jax.random.PRNGKey(0)
    key, xk, xk2 = jax.random.split(key, 3)
    x = jax.random.normal(xk, (batch, num_inputs), jnp.float32)

    weights, biases = init_task_network_params(
        key, num_inputs, num_outputs, hidden_layer_size, hidden_layer_count)

    w_bf16, b_f32 = pack_params(weights, biases, jnp.bfloat16)   # fast path
    w_f32, _ = pack_params(weights, biases, jnp.float32)         # validation path

    fwd_f32 = jax.jit(lambda xx: task_network_forward(xx, w_f32, b_f32, num_outputs))
    fwd_bf16 = jax.jit(lambda xx: task_network_forward(xx, w_bf16, b_f32, num_outputs))

    ref = task_network_reference(x, weights, biases)

    # f32 compute path: tight check against the pure-JAX reference.
    out_f32 = jax.block_until_ready(fwd_f32(x))
    assert out_f32.shape == (batch, num_outputs)
    assert jnp.allclose(out_f32, ref, atol=1e-4, rtol=1e-4), "f32 mismatch vs reference"

    # bf16 MXU path (default / fast): relaxed tolerance per bf16 precision.
    out_bf16 = jax.block_until_ready(fwd_bf16(x))
    assert out_bf16.shape == (batch, num_outputs)
    assert jnp.allclose(out_bf16, ref, atol=5e-2, rtol=5e-2), "bf16 mismatch vs reference"

    # Multi-block path (exercises grid > 1, even-grid rounding, batch padding).
    batch2 = 300
    x2 = jax.random.normal(xk2, (batch2, num_inputs), jnp.float32)
    fwd_multi = jax.jit(lambda xx: task_network_forward(
        xx, w_f32, b_f32, num_outputs, block_batch=64))
    out2 = jax.block_until_ready(fwd_multi(x2))
    ref2 = task_network_reference(x2, weights, biases)
    assert out2.shape == (batch2, num_outputs)
    assert jnp.allclose(out2, ref2, atol=1e-4, rtol=1e-4), "multi-block mismatch"

    print("KERNEL_OK")
</pallas_src>

<mosaic_0001>
module attributes {stable_mosaic.version = 11 : i64} {
  func.func @_mlp_kernel(%arg0: i32, %arg1: memref<8x16xf32, #tpu.memory_space<vmem>>, %arg2: memref<4x128x128xf32, #tpu.memory_space<vmem>>, %arg3: memref<4x1x128xf32, #tpu.memory_space<vmem>>, %arg4: memref<8x4xf32, #tpu.memory_space<vmem>>) attributes {dimension_semantics = [#tpu.dimension_semantics<parallel>], iteration_bounds = array<i64: 1>, scalar_prefetch = 0 : i64, scratch_operands = 0 : i64, tpu.core_type = #tpu.core_type<tc>, window_params = [{transform_indices = @transform_0, window_bounds = array<i64: 8, 16>}, {pipeline_mode = #tpu.pipeline_mode<synchronous>, transform_indices = @transform_1, window_bounds = array<i64: 4, 128, 128>}, {pipeline_mode = #tpu.pipeline_mode<synchronous>, transform_indices = @transform_2, window_bounds = array<i64: 4, 1, 128>}, {transform_indices = @transform_3, window_bounds = array<i64: 8, 4>}]} {
    %c0 = arith.constant 0 : index
    %c0_0 = arith.constant 0 : index
    %0 = vector.load %arg1[%c0, %c0_0] : memref<8x16xf32, #tpu.memory_space<vmem>>, vector<8x16xf32>
    %c0_1 = arith.constant 0 : index
    %c0_2 = arith.constant 0 : index
    %c0_3 = arith.constant 0 : index
    %1 = vector.load %arg2[%c0_1, %c0_2, %c0_3] : memref<4x128x128xf32, #tpu.memory_space<vmem>>, vector<1x16x128xf32>
    %2 = vector.shape_cast %1 : vector<1x16x128xf32> to vector<16x128xf32>
    %cst = arith.constant dense<0.000000e+00> : vector<8x128xf32>
    %3 = tpu.matmul %0, %2, %cst {dimension_numbers = #tpu.dot_dimension_numbers<[1], [0], [0], [1], [0, 0, 1, 1], [], []>} : vector<8x16xf32>, vector<16x128xf32>, vector<8x128xf32> -> vector<8x128xf32>
    %c0_4 = arith.constant 0 : index
    %c0_5 = arith.constant 0 : index
    %c0_6 = arith.constant 0 : index
    %4 = vector.load %arg3[%c0_4, %c0_5, %c0_6] : memref<4x1x128xf32, #tpu.memory_space<vmem>>, vector<1x1x128xf32>
    %5 = vector.shape_cast %4 : vector<1x1x128xf32> to vector<1x128xf32>
    %6 = vector.broadcast %5 : vector<1x128xf32> to vector<8x128xf32>
    %7 = arith.addf %3, %6 : vector<8x128xf32>
    %cst_7 = arith.constant 0.000000e+00 : f32
    %8 = vector.broadcast %cst_7 : f32 to vector<8x128xf32>
    %9 = arith.cmpf oge, %7, %8 : vector<8x128xf32>
    %cst_8 = arith.constant 1.000000e-01 : f32
    %10 = vector.broadcast %cst_8 : f32 to vector<8x128xf32>
    %11 = arith.mulf %10, %7 : vector<8x128xf32>
    %12 = arith.select %9, %7, %11 : vector<8x128xi1>, vector<8x128xf32>
    %c1 = arith.constant 1 : index
    %c0_9 = arith.constant 0 : index
    %c0_10 = arith.constant 0 : index
    %13 = vector.load %arg2[%c1, %c0_9, %c0_10] : memref<4x128x128xf32, #tpu.memory_space<vmem>>, vector<1x128x128xf32>
    %14 = vector.shape_cast %13 : vector<1x128x128xf32> to vector<128x128xf32>
    %cst_11 = arith.constant dense<0.000000e+00> : vector<8x128xf32>
    %15 = tpu.matmul %12, %14, %cst_11 {dimension_numbers = #tpu.dot_dimension_numbers<[1], [0], [0], [1], [0, 0, 1, 1], [], []>} : vector<8x128xf32>, vector<128x128xf32>, vector<8x128xf32> -> vector<8x128xf32>
    %c1_12 = arith.constant 1 : index
    %c0_13 = arith.constant 0 : index
    %c0_14 = arith.constant 0 : index
    %16 = vector.load %arg3[%c1_12, %c0_13, %c0_14] : memref<4x1x128xf32, #tpu.memory_space<vmem>>, vector<1x1x128xf32>
    %17 = vector.shape_cast %16 : vector<1x1x128xf32> to vector<1x128xf32>
    %18 = vector.broadcast %17 : vector<1x128xf32> to vector<8x128xf32>
    %19 = arith.addf %15, %18 : vector<8x128xf32>
    %cst_15 = arith.constant 0.000000e+00 : f32
    %20 = vector.broadcast %cst_15 : f32 to vector<8x128xf32>
    %21 = arith.cmpf oge, %19, %20 : vector<8x128xf32>
    %cst_16 = arith.constant 1.000000e-01 : f32
    %22 = vector.broadcast %cst_16 : f32 to vector<8x128xf32>
    %23 = arith.mulf %22, %19 : vector<8x128xf32>
    %24 = arith.select %21, %19, %23 : vector<8x128xi1>, vector<8x128xf32>
    %c2 = arith.constant 2 : index
    %c0_17 = arith.constant 0 : index
    %c0_18 = arith.constant 0 : index
    %25 = vector.load %arg2[%c2, %c0_17, %c0_18] : memref<4x128x128xf32, #tpu.memory_space<vmem>>, vector<1x128x128xf32>
    %26 = vector.shape_cast %25 : vector<1x128x128xf32> to vector<128x128xf32>
    %cst_19 = arith.constant dense<0.000000e+00> : vector<8x128xf32>
    %27 = tpu.matmul %24, %26, %cst_19 {dimension_numbers = #tpu.dot_dimension_numbers<[1], [0], [0], [1], [0, 0, 1, 1], [], []>} : vector<8x128xf32>, vector<128x128xf32>, vector<8x128xf32> -> vector<8x128xf32>
    %c2_20 = arith.constant 2 : index
    %c0_21 = arith.constant 0 : index
    %c0_22 = arith.constant 0 : index
    %28 = vector.load %arg3[%c2_20, %c0_21, %c0_22] : memref<4x1x128xf32, #tpu.memory_space<vmem>>, vector<1x1x128xf32>
    %29 = vector.shape_cast %28 : vector<1x1x128xf32> to vector<1x128xf32>
    %30 = vector.broadcast %29 : vector<1x128xf32> to vector<8x128xf32>
    %31 = arith.addf %27, %30 : vector<8x128xf32>
    %cst_23 = arith.constant 0.000000e+00 : f32
    %32 = vector.broadcast %cst_23 : f32 to vector<8x128xf32>
    %33 = arith.cmpf oge, %31, %32 : vector<8x128xf32>
    %cst_24 = arith.constant 1.000000e-01 : f32
    %34 = vector.broadcast %cst_24 : f32 to vector<8x128xf32>
    %35 = arith.mulf %34, %31 : vector<8x128xf32>
    %36 = arith.select %33, %31, %35 : vector<8x128xi1>, vector<8x128xf32>
    %c3 = arith.constant 3 : index
    %c0_25 = arith.constant 0 : index
    %c0_26 = arith.constant 0 : index
    %37 = vector.load %arg2[%c3, %c0_25, %c0_26] : memref<4x128x128xf32, #tpu.memory_space<vmem>>, vector<1x128x128xf32>
    %38 = vector.shape_cast %37 : vector<1x128x128xf32> to vector<128x128xf32>
    %cst_27 = arith.constant dense<0.000000e+00> : vector<8x128xf32>
    %39 = tpu.matmul %36, %38, %cst_27 {dimension_numbers = #tpu.dot_dimension_numbers<[1], [0], [0], [1], [0, 0, 1, 1], [], []>} : vector<8x128xf32>, vector<128x128xf32>, vector<8x128xf32> -> vector<8x128xf32>
    %c3_28 = arith.constant 3 : index
    %c0_29 = arith.constant 0 : index
    %c0_30 = arith.constant 0 : index
    %40 = vector.load %arg3[%c3_28, %c0_29, %c0_30] : memref<4x1x128xf32, #tpu.memory_space<vmem>>, vector<1x1x128xf32>
    %41 = vector.shape_cast %40 : vector<1x1x128xf32> to vector<1x128xf32>
    %42 = vector.broadcast %41 : vector<1x128xf32> to vector<8x128xf32>
    %43 = arith.addf %39, %42 : vector<8x128xf32>
    %44 = vector.extract_strided_slice %43 {offsets = [0, 0], sizes = [8, 4], strides = [1, 1]} : vector<8x128xf32> to vector<8x4xf32>
    %c0_31 = arith.constant 0 : index
    %c0_32 = arith.constant 0 : index
    %45 = vector.load %arg4[%c0_31, %c0_32] : memref<8x4xf32, #tpu.memory_space<vmem>>, vector<8x4xf32>
    tpu.vector_store %arg4[%c0_31, %c0_32], %44 {strides = array<i32>} : memref<8x4xf32, #tpu.memory_space<vmem>>, vector<8x4xf32>,
    return
  }
  func.func @transform_0(%arg0: i32) -> (i32, i32) {
    %c0_i32 = arith.constant 0 : i32
    %c0_i32_0 = arith.constant 0 : i32
    return %arg0, %c0_i32 : i32, i32
  }
  func.func @transform_1(%arg0: i32) -> (i32, i32, i32) {
    %c0_i32 = arith.constant 0 : i32
    %c0_i32_0 = arith.constant 0 : i32
    %c0_i32_1 = arith.constant 0 : i32
    %c0_i32_2 = arith.constant 0 : i32
    return %c0_i32, %c0_i32_0, %c0_i32_1 : i32, i32, i32
  }
  func.func @transform_2(%arg0: i32) -> (i32, i32, i32) {
    %c0_i32 = arith.constant 0 : i32
    %c0_i32_0 = arith.constant 0 : i32
    %c0_i32_1 = arith.constant 0 : i32
    %c0_i32_2 = arith.constant 0 : i32
    return %c0_i32, %c0_i32_0, %c0_i32_1 : i32, i32, i32
  }
  func.func @transform_3(%arg0: i32) -> (i32, i32) {
    %c0_i32 = arith.constant 0 : i32
    %c0_i32_0 = arith.constant 0 : i32
    return %arg0, %c0_i32 : i32, i32
  }
}

</mosaic_0001>

<llo_original>
// kernel: _lambda_.1
$region0: #{_lambda_.1}
  #allocation0 [shape = 'u32[]', space=smem, size = 0x4, offset = 0x4, fixed_abs, tag = 'smem constant byte address 0x4 - core index']
  #allocation1 [shape = 'u32[72,128]{1,0:T(1,128)}', space=vmem, size = 0x9000, scoped, tag = 'internal scratch']
  %s0 = inlined_call_operand.hbm [shape: f32[8,16], index: 0, kind: input, shape index: {}]
  %s1 = inlined_call_operand.hbm [shape: f32[4,128,128], index: 1, kind: input, shape index: {}]
  %s2 = inlined_call_operand.hbm [shape: f32[4,1,128], index: 2, kind: input, shape index: {}]
  %s3 = inlined_call_operand.vmem [shape: f32[8,4], index: 3, kind: output, shape index: {}]
  %s4 = sld [smem:[#allocation0]]
  $region34: #{_lambda_.1} parent=0
    _
  %s6 = ssub.s32 1, %s4
  %s7 = scalar_select 0, %s6, %s4
  $region1: #{_lambda_.1} parent=0
    #allocation2 [shape = 'u8[4096]{0}', space=vmem, size = 0x1000, scoped, tag = 'input window, operand 0, single buffered']
    #allocation3 [shape = 's32[1]{0}', space=sflag, size = 0x4, scoped, tag = 'scoped memory for _lambda_.1']
    #allocation4 [shape = 'u8[262144]{0}', space=vmem, size = 0x40000, scoped, tag = 'input window, operand 1, single buffered']
    #allocation5 [shape = 's32[1]{0}', space=sflag, size = 0x4, scoped, tag = 'scoped memory for _lambda_.1']
    #allocation6 [shape = 'u8[2048]{0}', space=vmem, size = 0x800, scoped, tag = 'input window, operand 2, single buffered']
    %8 = vsyncpa [#allocation3], 0
    %9 = vsyncpa [#allocation5], 0
    // Predicated region
    $region2: #{_lambda_.1} parent=1 // pred_check
      _
    $region3: #{_lambda_.1} parent=1 // pred_check_branch
      %11 = sbr.rel (0) target = $region5
    $region4: #{_lambda_.1} parent=1 // pred_region
      %13 = vsyncadd [#allocation3], 0
      %s15 = sshll.u32 %s0, 4
      %s16 = int_to_ptr.hbm [resolvable:$true] %s15
      %s17 = sshll.u32 [#allocation2], 4
      %s18 = int_to_ptr.vmem [resolvable:$true] %s17
      %20 = dma.hbm_to_vmem [thread:$0]  %s16, 128, %s18, [#allocation3]
    $region5: #{_lambda_.1} parent=1 // pred_fallthru
      _
    // Predicated region
    $region6: #{_lambda_.1} parent=1 // pred_check
      _
    $region7: #{_lambda_.1} parent=1 // pred_check_branch
      %22 = sbr.rel (0) target = $region9
    $region8: #{_lambda_.1} parent=1 // pred_region
      %24 = vsyncadd [#allocation5], 0
      %s25 = sshll.u32 %s1, 4
      %s26 = int_to_ptr.hbm [resolvable:$true] %s25
      %s27 = sshll.u32 [#allocation4], 4
      %s28 = int_to_ptr.vmem [resolvable:$true] %s27
      %33 = dma.hbm_to_vmem [thread:$0]  %s26, 8192, %s28, [#allocation5], 128, 128, 8
    $region9: #{_lambda_.1} parent=1 // pred_fallthru
      _
    // Predicated region
    $region10: #{_lambda_.1} parent=1 // pred_check
      _
    $region11: #{_lambda_.1} parent=1 // pred_check_branch
      %35 = sbr.rel (0) target = $region13
    $region12: #{_lambda_.1} parent=1 // pred_region
      %37 = vsyncadd [#allocation5], 0
      %s38 = sshll.u32 %s2, 4
      %s39 = int_to_ptr.hbm [resolvable:$true] %s38
      %s40 = sshll.u32 [#allocation6], 4
      %s41 = int_to_ptr.vmem [resolvable:$true] %s40
      %46 = dma.hbm_to_vmem [thread:$0]  %s39, 64, %s41, [#allocation5], 16, 16, 1
    $region13: #{_lambda_.1} parent=1 // pred_fallthru
      _
    // Predicated region
    $region14: #{_lambda_.1} parent=1 // pred_check
      _
    $region15: #{_lambda_.1} parent=1 // pred_check_branch
      %48 = sbr.rel (0) target = $region17
    $region16: #{_lambda_.1} parent=1 // pred_region
      %50 = dma.done [#allocation3], 128
    $region17: #{_lambda_.1} parent=1 // pred_fallthru
      _
    // Predicated region
    $region18: #{_lambda_.1} parent=1 // pred_check
      _
    $region19: #{_lambda_.1} parent=1 // pred_check_branch
      %52 = sbr.rel (0) target = $region21
    $region20: #{_lambda_.1} parent=1 // pred_region
      %54 = dma.done [#allocation5], 8192
    $region21: #{_lambda_.1} parent=1 // pred_fallthru
      _
    // Predicated region
    $region22: #{_lambda_.1} parent=1 // pred_check
      _
    $region23: #{_lambda_.1} parent=1 // pred_check_branch
      %56 = sbr.rel (0) target = $region25
    $region24: #{_lambda_.1} parent=1 // pred_region
      %58 = dma.done [#allocation5], 64
    $region25: #{_lambda_.1} parent=1 // pred_fallthru
      _
    %v59 = vld [vmem:[#allocation2] sm:$0xff]
    %v60 = vld [vmem:[#allocation4] sm:$0xff]
    %v61 = vld [vmem:[#allocation4 + $0x8] sm:$0xff]
    %v62 = vld [vmem:[#allocation6] sm:$0x1]
    %v64 = vperm.slane %v62, 0
    %vm66 = vcmask 130048
    %v68 = vsel %vm66, %v59, 0
    %70 = vmatpush.msra.mxu0 0.0
    %71 = vmatpush.msra.mxu0 0.0
    %72 = vmatpush.msra.mxu0 0.0
    %73 = vmatpush.msra.mxu0 0.0
    %74 = vmatpush.msra.mxu0 0.0
    %75 = vmatpush.msra.mxu0 0.0
    %76 = vmatpush.msra.mxu0 0.0
    %77 = vmatpush.msra.mxu0 0.0
    %78 = vmatpush.msra.mxu0 0.0
    %79 = vmatpush.msra.mxu0 0.0
    %80 = vmatpush.msra.mxu0 0.0
    %81 = vmatpush.msra.mxu0 0.0
    %82 = vmatpush.msra.mxu0 0.0
    %83 = vmatpush.msra.mxu0 0.0
    %84 = vmatpush.msra.mxu0 %v61
    %85 = vmatpush.msra.mxu0 %v60
    %86 = vmatmul.f32.gmra.mxu0 %v68
    %v87 = vpop.f32.mrf.mxu0
    %v88 = vadd.f32 %v64, %v87
    %89 = vdwg.mxu0
    %vm90 = vcmp.ge.f32.partialorder %v88, 0.0
    %v91 = vmul.f32 %v88, 0.1
    %v92 = vsel %vm90, %v88, %v91
    %s93 = scalar_lea.vmem [#allocation4], 128
    %v94 = vld [vmem:[%s93] sm:$0xff]
    %v95 = vld [vmem:[%s93 + $0x8] sm:$0xff]
    %v96 = vld [vmem:[%s93 + $0x10] sm:$0xff]
    %v97 = vld [vmem:[%s93 + $0x18] sm:$0xff]
    %v98 = vld [vmem:[%s93 + $0x20] sm:$0xff]
    %v99 = vld [vmem:[%s93 + $0x28] sm:$0xff]
    %v100 = vld [vmem:[%s93 + $0x30] sm:$0xff]
    %v101 = vld [vmem:[%s93 + $0x38] sm:$0xff]
    %v102 = vld [vmem:[%s93 + $0x40] sm:$0xff]
    %v103 = vld [vmem:[%s93 + $0x48] sm:$0xff]
    %v104 = vld [vmem:[%s93 + $0x50] sm:$0xff]
    %v105 = vld [vmem:[%s93 + $0x58] sm:$0xff]
    %v106 = vld [vmem:[%s93 + $0x60] sm:$0xff]
    %v107 = vld [vmem:[%s93 + $0x68] sm:$0xff]
    %v108 = vld [vmem:[%s93 + $0x70] sm:$0xff]
    %v109 = vld [vmem:[%s93 + $0x78] sm:$0xff]
    %s110 = scalar_lea.vmem [#allocation6], 1
    %v111 = vld [vmem:[%s110] sm:$0x1]
    %v113 = vperm.slane %v111, 0
    %115 = vmatpush.msra.mxu0 %v109
    %116 = vmatpush.msra.mxu0 %v108
    %117 = vmatpush.msra.mxu0 %v107
    %118 = vmatpush.msra.mxu0 %v106
    %119 = vmatpush.msra.mxu0 %v105
    %120 = vmatpush.msra.mxu0 %v104
    %121 = vmatpush.msra.mxu0 %v103
    %122 = vmatpush.msra.mxu0 %v102
    %123 = vmatpush.msra.mxu0 %v101
    %124 = vmatpush.msra.mxu0 %v100
    %125 = vmatpush.msra.mxu0 %v99
    %126 = vmatpush.msra.mxu0 %v98
    %127 = vmatpush.msra.mxu0 %v97
    %128 = vmatpush.msra.mxu0 %v96
    %129 = vmatpush.msra.mxu0 %v95
    %130 = vmatpush.msra.mxu0 %v94
    %131 = vmatmul.f32.gmra.mxu0 %v92
    %v132 = vpop.f32.mrf.mxu0
    %v133 = vadd.f32 %v113, %v132
    %134 = vdwg.mxu0
    %vm135 = vcmp.ge.f32.partialorder %v133, 0.0
    %v136 = vmul.f32 %v133, 0.1
    %v137 = vsel %vm135, %v133, %v136
    %s138 = scalar_lea.vmem [#allocation4], 256
    %v139 = vld [vmem:[%s138] sm:$0xff]
    %v140 = vld [vmem:[%s138 + $0x8] sm:$0xff]
    %v141 = vld [vmem:[%s138 + $0x10] sm:$0xff]
    %v142 = vld [vmem:[%s138 + $0x18] sm:$0xff]
    %v143 = vld [vmem:[%s138 + $0x20] sm:$0xff]
    %v144 = vld [vmem:[%s138 + $0x28] sm:$0xff]
    %v145 = vld [vmem:[%s138 + $0x30] sm:$0xff]
    %v146 = vld [vmem:[%s138 + $0x38] sm:$0xff]
    %v147 = vld [vmem:[%s138 + $0x40] sm:$0xff]
    %v148 = vld [vmem:[%s138 + $0x48] sm:$0xff]
    %v149 = vld [vmem:[%s138 + $0x50] sm:$0xff]
    %v150 = vld [vmem:[%s138 + $0x58] sm:$0xff]
    %v151 = vld [vmem:[%s138 + $0x60] sm:$0xff]
    %v152 = vld [vmem:[%s138 + $0x68] sm:$0xff]
    %v153 = vld [vmem:[%s138 + $0x70] sm:$0xff]
    %v154 = vld [vmem:[%s138 + $0x78] sm:$0xff]
    %s155 = scalar_lea.vmem [#allocation6], 2
    %v156 = vld [vmem:[%s155] sm:$0x1]
    %v158 = vperm.slane %v156, 0
    %160 = vmatpush.msra.mxu0 %v154
    %161 = vmatpush.msra.mxu0 %v153
    %162 = vmatpush.msra.mxu0 %v152
    %163 = vmatpush.msra.mxu0 %v151
    %164 = vmatpush.msra.mxu0 %v150
    %165 = vmatpush.msra.mxu0 %v149
    %166 = vmatpush.msra.mxu0 %v148
    %167 = vmatpush.msra.mxu0 %v147
    %168 = vmatpush.msra.mxu0 %v146
    %169 = vmatpush.msra.mxu0 %v145
    %170 = vmatpush.msra.mxu0 %v144
    %171 = vmatpush.msra.mxu0 %v143
    %172 = vmatpush.msra.mxu0 %v142
    %173 = vmatpush.msra.mxu0 %v141
    %174 = vmatpush.msra.mxu0 %v140
    %175 = vmatpush.msra.mxu0 %v139
    %176 = vmatmul.f32.gmra.mxu0 %v137
    %v177 = vpop.f32.mrf.mxu0
    %v178 = vadd.f32 %v158, %v177
    %179 = vdwg.mxu0
    %vm180 = vcmp.ge.f32.partialorder %v178, 0.0
    %v181 = vmul.f32 %v178, 0.1
    %v182 = vsel %vm180, %v178, %v181
    %s183 = scalar_lea.vmem [#allocation4], 384
    %v184 = vld [vmem:[%s183] sm:$0xff]
    %v185 = vld [vmem:[%s183 + $0x8] sm:$0xff]
    %v186 = vld [vmem:[%s183 + $0x10] sm:$0xff]
    %v187 = vld [vmem:[%s183 + $0x18] sm:$0xff]
    %v188 = vld [vmem:[%s183 + $0x20] sm:$0xff]
    %v189 = vld [vmem:[%s183 + $0x28] sm:$0xff]
    %v190 = vld [vmem:[%s183 + $0x30] sm:$0xff]
    %v191 = vld [vmem:[%s183 + $0x38] sm:$0xff]
    %v192 = vld [vmem:[%s183 + $0x40] sm:$0xff]
    %v193 = vld [vmem:[%s183 + $0x48] sm:$0xff]
    %v194 = vld [vmem:[%s183 + $0x50] sm:$0xff]
    %v195 = vld [vmem:[%s183 + $0x58] sm:$0xff]
    %v196 = vld [vmem:[%s183 + $0x60] sm:$0xff]
    %v197 = vld [vmem:[%s183 + $0x68] sm:$0xff]
    %v198 = vld [vmem:[%s183 + $0x70] sm:$0xff]
    %v199 = vld [vmem:[%s183 + $0x78] sm:$0xff]
    %s200 = scalar_lea.vmem [#allocation6], 3
    %v201 = vld [vmem:[%s200] sm:$0x1]
    %v203 = vperm.slane %v201, 0
    %205 = vmatpush.msra.mxu0 %v199
    %206 = vmatpush.msra.mxu0 %v198
    %207 = vmatpush.msra.mxu0 %v197
    %208 = vmatpush.msra.mxu0 %v196
    %209 = vmatpush.msra.mxu0 %v195
    %210 = vmatpush.msra.mxu0 %v194
    %211 = vmatpush.msra.mxu0 %v193
    %212 = vmatpush.msra.mxu0 %v192
    %213 = vmatpush.msra.mxu0 %v191
    %214 = vmatpush.msra.mxu0 %v190
    %215 = vmatpush.msra.mxu0 %v189
    %216 = vmatpush.msra.mxu0 %v188
    %217 = vmatpush.msra.mxu0 %v187
    %218 = vmatpush.msra.mxu0 %v186
    %219 = vmatpush.msra.mxu0 %v185
    %220 = vmatpush.msra.mxu0 %v184
    %221 = vmatmul.f32.gmra.mxu0 %v182
    %v222 = vpop.f32.mrf.mxu0
    %v223 = vadd.f32 %v203, %v222
    %224 = vdwg.mxu0
    %vm225 = vcmask 31744
    %226 = vst.msk [vmem:[%s3] sm:$0xff] %vm225, %v223
    // Predicated region
    $region26: #{_lambda_.1} parent=1 // pred_check
      _
    $region27: #{_lambda_.1} parent=1 // pred_check_branch
      %228 = sbr.rel (0) target = $region29
    $region28: #{_lambda_.1} parent=1 // pred_region
      _
    $region29: #{_lambda_.1} parent=1 // pred_fallthru
      _
    // Predicated region
    $region30: #{_lambda_.1} parent=1 // pred_check
      _
    $region31: #{_lambda_.1} parent=1 // pred_check_branch
      %230 = sbr.rel (0) target = $region33
    $region32: #{_lambda_.1} parent=1 // pred_region
      _
    $region33: #{_lambda_.1} parent=1 // pred_fallthru
      _
    %231 = vsyncpa [#allocation3], 1
    %232 = vsyncpa [#allocation5], 1

</llo_original>
